<compile_context>
chip_gen: v7x
topology: tpu7x:2x2x1
jax: 0.10.0
libtpu: 0.0.40
codegen_flags: <defaults>
</compile_context>

<pallas_src>
import functools
from dataclasses import dataclass

import jax
import jax.numpy as jnp
from jax.experimental import pallas as pl
from jax.experimental.pallas import tpu as pltpu


@dataclass
class LinearPruningArgs:
    method: str = "sigmoied_threshold"
    submethod: str = "default"
    ampere_method: str = "disabled"
    block_rows: int = 8
    block_cols: int = 16
    min_elements: float = 0.0
    soft_temperature: float = 0.0


# ----------------------------------------------------------------------------
# Pallas kernel: sigmoid-threshold binarization + block expansion via two tiny
# in-kernel one-hot MXU dots, written straight into a dense 2-D output tile.
# ----------------------------------------------------------------------------
def _mask_expand_kernel(scores_ref, thr_ref, out_ref, *, block_rows, block_cols):
    # scores_ref : (sr, csub)                        block-level mask scores (VMEM)
    # thr_ref    : (1, 1)                            threshold               (SMEM)
    # out_ref    : (sr*block_rows, csub*block_cols)  expanded mask tile      (VMEM)
    sr, csub = scores_ref.shape
    prows, cc = out_ref.shape
    thr = thr_ref[0, 0]

    # ThresholdBinarizer (sigmoied): sigmoid(s) > t.  Scores are tiny -> EUP work is free.
    s = scores_ref[...]
    sig = 1.0 / (1.0 + jnp.exp(-s))
    binar = (sig > thr).astype(jnp.bfloat16)                             # (sr, csub), 0/1

    # Column-wise repeat_interleave as one tiny MXU dot with an in-kernel one-hot
    # expander (zero HBM bytes).  Division-free construction (works for any block_cols):
    #   e_c[c, j] = (c*block_cols <= j < (c+1)*block_cols)
    col_id = jax.lax.broadcasted_iota(jnp.int32, (csub, cc), 1)
    col_lo = jax.lax.broadcasted_iota(jnp.int32, (csub, cc), 0) * block_cols
    e_c = ((col_id >= col_lo) & (col_id < col_lo + block_cols)).astype(jnp.bfloat16)
    colrep = jnp.dot(binar, e_c,
                     preferred_element_type=jnp.float32).astype(jnp.bfloat16)  # (sr, cc)

    # Row-wise repeat_interleave as a second tiny one-hot dot:
    #   e_r[p, r] = (r*block_rows <= p < (r+1)*block_rows)
    row_id = jax.lax.broadcasted_iota(jnp.int32, (prows, sr), 0)
    row_lo = jax.lax.broadcasted_iota(jnp.int32, (prows, sr), 1) * block_rows
    e_r = ((row_id >= row_lo) & (row_id < row_lo + block_rows)).astype(jnp.bfloat16)

    out_ref[...] = jnp.dot(e_r, colrep,
                           preferred_element_type=jnp.float32).astype(out_ref.dtype)


# ----------------------------------------------------------------------------
# Tile pickers.
# ----------------------------------------------------------------------------
def _pick_col_tile(C, block_cols, onehot_budget=4 << 20):
    """Score columns per grid step (csub).

    csub must divide C and be a multiple of 128 (or the full extent C) so both the
    scores block and the output block stay lane-dense.  Capped so the in-kernel one-hot
    expander (csub x csub*block_cols bf16) stays within budget for very wide weights.
    """
    def onehot_bytes(c):
        return c * c * block_cols * 2
    if onehot_bytes(C) <= onehot_budget:
        return C
    cands = [d for d in range(128, C, 128) if C % d == 0]
    fitting = [d for d in cands if onehot_bytes(d) <= onehot_budget]
    if fitting:
        return max(fitting)
    if cands:
        return min(cands)
    # TODO(synk): very wide C not divisible by 128 -> full-width fallback (may need a
    #             larger scoped-VMEM limit).
    return C


def _pick_row_tile(R, block_rows, cc, n_col_steps, out_itemsize, target_bytes=1 << 20):
    """Score rows per grid step (sr).

    sr must divide R and be a multiple of 8 (or the full extent R) per the TPU (8, 128)
    block rule; sized so the output tile stays ~1 MiB (>=85% of HBM roofline while
    leaving scoped-VMEM slack on v5e/v7x), and split further if that is needed to give
    the grid >= 2 parallel steps (v7x megacore).
    """
    cands = [d for d in range(1, R + 1) if R % d == 0 and (d % 8 == 0 or d == R)]
    bytes_per_srow = block_rows * cc * out_itemsize
    fitting = [d for d in cands if d * bytes_per_srow <= target_bytes] or [min(cands)]
    sr = max(fitting)
    if (R // sr) * n_col_steps < 2:
        split = [d for d in fitting if (R // d) * n_col_steps >= 2]
        if split:
            sr = max(split)
    return sr


# ----------------------------------------------------------------------------
# Wrapper.
# ----------------------------------------------------------------------------
@functools.partial(jax.jit, static_argnames=("block_rows", "block_cols", "out_dtype"))
def mask_forward(mask_scores, threshold, block_rows, block_cols, out_dtype=jnp.bfloat16):
    """Pallas implementation of MaskModule.forward for sigmoied_threshold / default."""
    R, C = mask_scores.shape
    rows, cols = R * block_rows, C * block_cols
    out_itemsize = jnp.dtype(out_dtype).itemsize

    csub = _pick_col_tile(C, block_cols)
    cc = csub * block_cols
    n_col_steps = C // csub
    sr = _pick_row_tile(R, block_rows, cc, n_col_steps, out_itemsize)
    n_row_steps = R // sr

    thr = jnp.asarray(threshold, jnp.float32).reshape(1, 1)

    kernel = functools.partial(_mask_expand_kernel,
                               block_rows=block_rows, block_cols=block_cols)

    # Advisory cost: tells XLA this is a large memory-bound op.
    n_steps = n_row_steps * n_col_steps
    flops = n_steps * (2 * sr * csub * cc + 2 * (sr * block_rows) * sr * cc)
    bytes_accessed = rows * cols * out_itemsize + n_col_steps * R * C * 4 + 4
    cost = pl.CostEstimate(flops=flops, transcendentals=n_col_steps * R * C,
                           bytes_accessed=bytes_accessed)

    return pl.pallas_call(
        kernel,
        out_shape=jax.ShapeDtypeStruct((rows, cols), out_dtype),
        grid=(n_row_steps, n_col_steps),
        in_specs=[
            pl.BlockSpec((sr, csub), lambda i, j: (i, j)),              # scores tile (VMEM)
            pl.BlockSpec(memory_space=pltpu.MemorySpace.SMEM),          # threshold   (SMEM)
        ],
        out_specs=pl.BlockSpec((sr * block_rows, cc), lambda i, j: (i, j)),
        compiler_params=pltpu.CompilerParams(
            dimension_semantics=("parallel", "parallel")),              # megacore-shardable
        cost_estimate=cost,
    )(mask_scores, thr)


# ----------------------------------------------------------------------------
# Thin JAX-side module mirroring MaskModule / LinearPruningContextModule.
# ----------------------------------------------------------------------------
class LinearPruningContextModule:
    def __init__(self, shape, args: LinearPruningArgs, key):
        assert shape[0] % args.block_rows == 0
        assert shape[1] % args.block_cols == 0
        self.args = args
        self.mask_size = (shape[0] // args.block_rows, shape[1] // args.block_cols)
        # init_masks: 'uniform' init with scale 0.5 (deterministic via PRNGKey).
        self.mask_scores = jax.random.uniform(
            key, self.mask_size, jnp.float32, minval=-0.5, maxval=0.5)


class MaskModule:
    def __init__(self, context_modules, args: LinearPruningArgs):
        self.context_modules = context_modules
        self.args = args

    def forward(self, weight, threshold, input):
        # method != 'magnitude' -> use mask_scores[0] (submethod 'default').
        scores = self.context_modules[0].mask_scores
        # bf16 mask output: 0/1 values are exact and HBM store bytes are halved
        # (the kernel is store-bound); pass out_dtype=jnp.float32 for a f32 mask.
        return mask_forward(scores, threshold,
                            block_rows=self.args.block_rows,
                            block_cols=self.args.block_cols,
                            out_dtype=jnp.bfloat16)


if __name__ == "__main__":
    key = jax.random.PRNGKey(0)
    k_w, k_s, k_x = jax.random.split(key, 3)

    args = LinearPruningArgs(method="sigmoied_threshold", submethod="default",
                             ampere_method="disabled",
                             block_rows=8, block_cols=16, min_elements=0.0)

    rows, cols = 64, 128                       # weight (out_features, in_features)
    weight = jax.random.normal(k_w, (rows, cols), jnp.float32)
    x = jax.random.normal(k_x, (2, cols), jnp.float32)   # unused by forward (as in torch)

    ctx = LinearPruningContextModule((rows, cols), args, k_s)
    module = MaskModule([ctx], args)

    threshold = 0.5
    mask = module.forward(weight, threshold, x)
    mask = jax.block_until_ready(mask)

    # Pure-JAX reference: sigmoid-threshold + repeat_interleave on both dims.
    ref_small = (jax.nn.sigmoid(ctx.mask_scores) > threshold).astype(jnp.float32)
    ref = jnp.repeat(jnp.repeat(ref_small, args.block_rows, axis=0),
                     args.block_cols, axis=1)

    assert mask.shape == (rows, cols)
    assert mask.dtype == jnp.bfloat16
    assert bool(jnp.all(mask.astype(jnp.float32) == ref))

    print("KERNEL_OK")
</pallas_src>

<mosaic_0001>
module attributes {stable_mosaic.version = 11 : i64} {
  func.func @_mask_expand_kernel(%arg0: i32, %arg1: i32, %arg2: memref<8x8xf32, #tpu.memory_space<vmem>>, %arg3: memref<1x1xf32, #tpu.memory_space<smem>>, %arg4: memref<64x128xbf16, #tpu.memory_space<vmem>>) attributes {dimension_semantics = [#tpu.dimension_semantics<parallel>, #tpu.dimension_semantics<parallel>], iteration_bounds = array<i64: 1, 1>, scalar_prefetch = 0 : i64, scratch_operands = 0 : i64, tpu.core_type = #tpu.core_type<tc>, window_params = [{transform_indices = @transform_0, window_bounds = array<i64: 8, 8>}, {transform_indices = @transform_1, window_bounds = array<i64: 1, 1>}, {transform_indices = @transform_2, window_bounds = array<i64: 64, 128>}]} {
    %c0 = arith.constant 0 : index
    %c0_0 = arith.constant 0 : index
    %0 = memref.load %arg3[%c0, %c0_0] : memref<1x1xf32, #tpu.memory_space<smem>>
    %c0_1 = arith.constant 0 : index
    %c0_2 = arith.constant 0 : index
    %1 = vector.load %arg2[%c0_1, %c0_2] : memref<8x8xf32, #tpu.memory_space<vmem>>, vector<8x8xf32>
    %cst = arith.constant 0.000000e+00 : f32
    %2 = vector.broadcast %cst : f32 to vector<8x8xf32>
    %3 = arith.subf %2, %1 : vector<8x8xf32>
    %4 = math.exp %3 : vector<8x8xf32>
    %cst_3 = arith.constant 1.000000e+00 : f32
    %5 = vector.broadcast %cst_3 : f32 to vector<8x8xf32>
    %6 = arith.addf %5, %4 : vector<8x8xf32>
    %cst_4 = arith.constant 1.000000e+00 : f32
    %7 = vector.broadcast %cst_4 : f32 to vector<8x8xf32>
    %8 = arith.divf %7, %6 : vector<8x8xf32>
    %9 = vector.broadcast %0 : f32 to vector<8x8xf32>
    %10 = arith.cmpf ogt, %8, %9 : vector<8x8xf32>
    %11 = arith.extui %10 : vector<8x8xi1> to vector<8x8xi32>
    %12 = arith.sitofp %11 : vector<8x8xi32> to vector<8x8xf32>
    %13 = arith.truncf %12 : vector<8x8xf32> to vector<8x8xbf16>
    %14 = tpu.iota {dimensions = array<i32: 1>} : vector<8x128xi32>
    %15 = tpu.iota {dimensions = array<i32: 0>} : vector<8x128xi32>
    %c16_i32 = arith.constant 16 : i32
    %16 = vector.broadcast %c16_i32 : i32 to vector<8x128xi32>
    %17 = arith.muli %15, %16 : vector<8x128xi32>
    %18 = arith.cmpi sge, %14, %17 : vector<8x128xi32>
    %c16_i32_5 = arith.constant 16 : i32
    %19 = vector.broadcast %c16_i32_5 : i32 to vector<8x128xi32>
    %20 = arith.addi %17, %19 : vector<8x128xi32>
    %21 = arith.cmpi slt, %14, %20 : vector<8x128xi32>
    %22 = arith.andi %18, %21 : vector<8x128xi1>
    %23 = arith.extui %22 : vector<8x128xi1> to vector<8x128xi32>
    %24 = arith.sitofp %23 : vector<8x128xi32> to vector<8x128xf32>
    %25 = arith.truncf %24 : vector<8x128xf32> to vector<8x128xbf16>
    %cst_6 = arith.constant dense<0.000000e+00> : vector<8x128xf32>
    %26 = tpu.matmul %13, %25, %cst_6 {dimension_numbers = #tpu.dot_dimension_numbers<[1], [0], [0], [1], [0, 0, 1, 1], [], []>} : vector<8x8xbf16>, vector<8x128xbf16>, vector<8x128xf32> -> vector<8x128xf32>
    %27 = arith.truncf %26 : vector<8x128xf32> to vector<8x128xbf16>
    %28 = tpu.iota {dimensions = array<i32: 0>} : vector<64x8xi32>
    %29 = tpu.iota {dimensions = array<i32: 1>} : vector<64x8xi32>
    %c8_i32 = arith.constant 8 : i32
    %30 = vector.broadcast %c8_i32 : i32 to vector<64x8xi32>
    %31 = arith.muli %29, %30 : vector<64x8xi32>
    %32 = arith.cmpi sge, %28, %31 : vector<64x8xi32>
    %c8_i32_7 = arith.constant 8 : i32
    %33 = vector.broadcast %c8_i32_7 : i32 to vector<64x8xi32>
    %34 = arith.addi %31, %33 : vector<64x8xi32>
    %35 = arith.cmpi slt, %28, %34 : vector<64x8xi32>
    %36 = arith.andi %32, %35 : vector<64x8xi1>
    %37 = arith.extui %36 : vector<64x8xi1> to vector<64x8xi32>
    %38 = arith.sitofp %37 : vector<64x8xi32> to vector<64x8xf32>
    %39 = arith.truncf %38 : vector<64x8xf32> to vector<64x8xbf16>
    %cst_8 = arith.constant dense<0.000000e+00> : vector<64x128xf32>
    %40 = tpu.matmul %39, %27, %cst_8 {dimension_numbers = #tpu.dot_dimension_numbers<[1], [0], [0], [1], [0, 0, 1, 1], [], []>} : vector<64x8xbf16>, vector<8x128xbf16>, vector<64x128xf32> -> vector<64x128xf32>
    %41 = arith.truncf %40 : vector<64x128xf32> to vector<64x128xbf16>
    %c0_9 = arith.constant 0 : index
    %c0_10 = arith.constant 0 : index
    %42 = vector.load %arg4[%c0_9, %c0_10] : memref<64x128xbf16, #tpu.memory_space<vmem>>, vector<64x128xbf16>
    tpu.vector_store %arg4[%c0_9, %c0_10], %41 {strides = array<i32>} : memref<64x128xbf16, #tpu.memory_space<vmem>>, vector<64x128xbf16>,
    return
  }
  func.func @transform_0(%arg0: i32, %arg1: i32) -> (i32, i32) {
    %c0_i32 = arith.constant 0 : i32
    return %arg0, %arg1 : i32, i32
  }
  func.func @transform_1(%arg0: i32, %arg1: i32) -> (i32, i32) {
    %c0_i32 = arith.constant 0 : i32
    %c0_i32_0 = arith.constant 0 : i32
    %c0_i32_1 = arith.constant 0 : i32
    return %c0_i32, %c0_i32_0 : i32, i32
  }
  func.func @transform_2(%arg0: i32, %arg1: i32) -> (i32, i32) {
    %c0_i32 = arith.constant 0 : i32
    return %arg0, %arg1 : i32, i32
  }
}

</mosaic_0001>

<llo_original>
// kernel: mask_forward.1
$region0: #{mask_forward.1}
  #allocation0 [shape = 'u32[]', space=smem, size = 0x4, offset = 0x4, fixed_abs, tag = 'smem constant byte address 0x4 - core index']
  #allocation1 [shape = 'u32[144,128]{1,0:T(1,128)}', space=vmem, size = 0x12000, scoped, tag = 'internal scratch']
  #allocation2 [shape = 'f32[1,1]{1,0:T(1,128)S(6)}', space=smem, size = 0x200, scoped, tag = 'scoped memory for mask_forward.1']
  %s0 = inlined_call_operand.hbm [shape: f32[8,8], index: 0, kind: input, shape index: {}]
  %s1 = inlined_call_operand.<no memory space> [shape: f32[1,1], index: 1, kind: input, shape index: {}]
  %s2 = inlined_call_operand.hbm [shape: bf16[64,128], index: 2, kind: output, shape index: {}]
  %s3 = sld [smem:[#allocation0]]
  $region22: #{mask_forward.1} parent=0
    _
  %s5 = ssub.s32 1, %s3
  %s6 = scalar_select 0, %s5, %s3
  %7 = sst [smem:[#allocation2]] %s1
  $region1: #{mask_forward.1} parent=0
    #allocation3 [shape = 'u8[4096]{0}', space=vmem, size = 0x1000, scoped, tag = 'input window, operand 0, single buffered']
    #allocation4 [shape = 's32[1]{0}', space=sflag, size = 0x4, scoped, tag = 'scoped memory for mask_forward.1']
    #allocation5 [shape = 's32[1]{0}', space=sflag, size = 0x4, scoped, tag = 'scoped memory for mask_forward.1']
    #allocation6 [shape = 'u8[16384]{0}', space=vmem, size = 0x4000, scoped, tag = 'output window, operand 0, single buffered']
    %8 = vsyncpa [#allocation4], 0
    %9 = vsyncpa [#allocation5], 0
    // Predicated region
    $region2: #{mask_forward.1} parent=1 // pred_check
      _
    $region3: #{mask_forward.1} parent=1 // pred_check_branch
      %11 = sbr.rel (0) target = $region5
    $region4: #{mask_forward.1} parent=1 // pred_region
      %s13 = ssub.s32 128, 128
      %14 = vsyncadd [#allocation4], %s13
      %s16 = sshll.u32 [#allocation3], 4
      %s17 = int_to_ptr.vmem [resolvable:$true] %s16
      %19 = dma.hbm_to_vmem [thread:$0]  %s0, 128, %s17, [#allocation4]
    $region5: #{mask_forward.1} parent=1 // pred_fallthru
      _
    // Predicated region
    $region6: #{mask_forward.1} parent=1 // pred_check
      _
    $region7: #{mask_forward.1} parent=1 // pred_check_branch
      %21 = sbr.rel (0) target = $region9
    $region8: #{mask_forward.1} parent=1 // pred_region
      _
    $region9: #{mask_forward.1} parent=1 // pred_fallthru
      _
    // Predicated region
    $region10: #{mask_forward.1} parent=1 // pred_check
      _
    $region11: #{mask_forward.1} parent=1 // pred_check_branch
      %23 = sbr.rel (0) target = $region13
    $region12: #{mask_forward.1} parent=1 // pred_region
      %24 = dma.done [#allocation4], 128
    $region13: #{mask_forward.1} parent=1 // pred_fallthru
      _
    %s26 = sld [smem:[#allocation2]]
    %v27 = vld [vmem:[#allocation3] sm:$0xff]
    %v28 = vsub.f32 0.0, %v27
    %v29 = vmul.f32 %v28, 1.442695
    %v30 = vpow.pop %v29
    %v31 = vadd.f32 %v30, 1.0
    %v32 = vrcp.pop %v31
    %v33 = vmul.f32 1.0, %v32
    %v34 = vstv %s26
    %vm35 = vcmp.gt.f32.partialorder %v33, %v34
    %v36 = vsel %vm35, 1, 0
    %v37 = vcvt.s32.f32 %v36
    %v38 = vpack.c.bf16 %v37, %v37
    %v39 = vlaneseq
    %v40 = vand.u32 %v39, 127
    %v41 = vlaneseq
    %v42 = vshrl.u32 %v41, 7
    %v43 = vmul.u32 %v42, 16
    %vm44 = vcmp.ge.s32.totalorder %v40, %v43
    %v45 = vadd.s32 %v43, 16
    %vm46 = vcmp.lt.s32.totalorder %v40, %v45
    %vm47 = vmand %vm44, %vm46
    %v48 = vsel %vm47, 1, 0
    %v49 = vcvt.s32.f32 %v48
    %v50 = vpack.c.bf16 %v49, %v49
    %vm51 = vcmask 64512
    %v53 = vsel %vm51, %v38, 0
    %vm55 = vcmask 1043456
    %v57 = vsel %vm55, %v50, 0
    %59 = vmatprep.subr.bf16.mxu0 0
    %60 = vmatpush1.bf16.msra.mxu0 %v57
    %61 = vmatprep.subr.bf16.mxu0 0
    %62 = vmatpush1.bf16.msra.mxu0 0
    %63 = vmatprep.subr.bf16.mxu0 0
    %64 = vmatpush1.bf16.msra.mxu0 0
    %65 = vmatprep.subr.bf16.mxu0 0
    %66 = vmatpush1.bf16.msra.mxu0 0
    %67 = vmatprep.subr.bf16.mxu0 0
    %68 = vmatpush1.bf16.msra.mxu0 0
    %69 = vmatprep.subr.bf16.mxu0 0
    %70 = vmatpush1.bf16.msra.mxu0 0
    %71 = vmatprep.subr.bf16.mxu0 0
    %72 = vmatpush1.bf16.msra.mxu0 0
    %73 = vmatprep.subr.bf16.mxu0 0
    %74 = vmatpush1.bf16.msra.mxu0 0
    %75 = vmatprep.subr.bf16.mxu0 0
    %76 = vmatpush1.bf16.msra.mxu0 0
    %77 = vmatprep.subr.bf16.mxu0 0
    %78 = vmatpush1.bf16.msra.mxu0 0
    %79 = vmatprep.subr.bf16.mxu0 0
    %80 = vmatpush1.bf16.msra.mxu0 0
    %81 = vmatprep.subr.bf16.mxu0 0
    %82 = vmatpush1.bf16.msra.mxu0 0
    %83 = vmatprep.subr.bf16.mxu0 0
    %84 = vmatpush1.bf16.msra.mxu0 0
    %85 = vmatprep.subr.bf16.mxu0 0
    %86 = vmatpush1.bf16.msra.mxu0 0
    %87 = vmatprep.subr.bf16.mxu0 0
    %88 = vmatpush1.bf16.msra.mxu0 0
    %89 = vmatprep.subr.bf16.mxu0 0
    %90 = vmatpush1.bf16.msra.mxu0 0
    %91 = vmatprep.mubr.bf16.mxu0 0
    %92 = vmatmul.mubr.bf16.gmra.mrb[0].mxu0 %v53
    %v93 = vpop.f32.mrb[0].mxu0
    %v94 = vadd.f32 0.0, %v93
    %v95 = vpop.f32.mrb[0].mxu0
    %v96 = vpop.f32.mrb[0].mxu0
    %v97 = vpop.f32.mrb[0].mxu0
    %98 = vdwg.mxu0
    %v99 = vpack.c.bf16 %v94, %v94
    %v100 = vadd.s32 %v42, 8
    %v101 = vadd.s32 %v42, 16
    %v102 = vadd.s32 %v42, 24
    %v103 = vadd.s32 %v42, 32
    %v104 = vadd.s32 %v42, 40
    %v105 = vadd.s32 %v42, 48
    %v106 = vadd.s32 %v42, 56
    %v107 = vmul.u32 %v40, 8
    %vm108 = vcmp.ge.s32.totalorder %v42, %v107
    %vm109 = vcmp.ge.s32.totalorder %v100, %v107
    %vm110 = vcmp.ge.s32.totalorder %v101, %v107
    %vm111 = vcmp.ge.s32.totalorder %v102, %v107
    %vm112 = vcmp.ge.s32.totalorder %v103, %v107
    %vm113 = vcmp.ge.s32.totalorder %v104, %v107
    %vm114 = vcmp.ge.s32.totalorder %v105, %v107
    %vm115 = vcmp.ge.s32.totalorder %v106, %v107
    %v116 = vadd.s32 %v107, 8
    %vm117 = vcmp.lt.s32.totalorder %v42, %v116
    %vm118 = vcmp.lt.s32.totalorder %v100, %v116
    %vm119 = vcmp.lt.s32.totalorder %v101, %v116
    %vm120 = vcmp.lt.s32.totalorder %v102, %v116
    %vm121 = vcmp.lt.s32.totalorder %v103, %v116
    %vm122 = vcmp.lt.s32.totalorder %v104, %v116
    %vm123 = vcmp.lt.s32.totalorder %v105, %v116
    %vm124 = vcmp.lt.s32.totalorder %v106, %v116
    %vm125 = vmand %vm108, %vm117
    %vm126 = vmand %vm109, %vm118
    %vm127 = vmand %vm110, %vm119
    %vm128 = vmand %vm111, %vm120
    %vm129 = vmand %vm112, %vm121
    %vm130 = vmand %vm113, %vm122
    %vm131 = vmand %vm114, %vm123
    %vm132 = vmand %vm115, %vm124
    %v133 = vsel %vm125, 1, 0
    %v134 = vsel %vm126, 1, 0
    %v135 = vsel %vm127, 1, 0
    %v136 = vsel %vm128, 1, 0
    %v137 = vsel %vm129, 1, 0
    %v138 = vsel %vm130, 1, 0
    %v139 = vsel %vm131, 1, 0
    %v140 = vsel %vm132, 1, 0
    %v141 = vcvt.s32.f32 %v133
    %v142 = vcvt.s32.f32 %v134
    %v143 = vcvt.s32.f32 %v135
    %v144 = vcvt.s32.f32 %v136
    %v145 = vcvt.s32.f32 %v137
    %v146 = vcvt.s32.f32 %v138
    %v147 = vcvt.s32.f32 %v139
    %v148 = vcvt.s32.f32 %v140
    %v149 = vpack.c.bf16 %v142, %v141
    %v150 = vpack.c.bf16 %v144, %v143
    %v151 = vpack.c.bf16 %v146, %v145
    %v152 = vpack.c.bf16 %v148, %v147
    %v154 = vsel %vm51, %v149, 0
    %v157 = vsel %vm51, %v150, 0
    %v160 = vsel %vm51, %v151, 0
    %v163 = vsel %vm51, %v152, 0
    %v166 = vsel %vm55, %v99, 0
    %168 = vmatprep.subr.bf16.mxu0 0
    %169 = vmatpush1.bf16.msra.mxu0 %v166
    %170 = vmatprep.subr.bf16.mxu0 0
    %171 = vmatpush1.bf16.msra.mxu0 0
    %172 = vmatprep.subr.bf16.mxu0 0
    %173 = vmatpush1.bf16.msra.mxu0 0
    %174 = vmatprep.subr.bf16.mxu0 0
    %175 = vmatpush1.bf16.msra.mxu0 0
    %176 = vmatprep.subr.bf16.mxu0 0
    %177 = vmatpush1.bf16.msra.mxu0 0
    %178 = vmatprep.subr.bf16.mxu0 0
    %179 = vmatpush1.bf16.msra.mxu0 0
    %180 = vmatprep.subr.bf16.mxu0 0
    %181 = vmatpush1.bf16.msra.mxu0 0
    %182 = vmatprep.subr.bf16.mxu0 0
    %183 = vmatpush1.bf16.msra.mxu0 0
    %184 = vmatprep.subr.bf16.mxu0 0
    %185 = vmatpush1.bf16.msra.mxu0 0
    %186 = vmatprep.subr.bf16.mxu0 0
    %187 = vmatpush1.bf16.msra.mxu0 0
    %188 = vmatprep.subr.bf16.mxu0 0
    %189 = vmatpush1.bf16.msra.mxu0 0
    %190 = vmatprep.subr.bf16.mxu0 0
    %191 = vmatpush1.bf16.msra.mxu0 0
    %192 = vmatprep.subr.bf16.mxu0 0
    %193 = vmatpush1.bf16.msra.mxu0 0
    %194 = vmatprep.subr.bf16.mxu0 0
    %195 = vmatpush1.bf16.msra.mxu0 0
    %196 = vmatprep.subr.bf16.mxu0 0
    %197 = vmatpush1.bf16.msra.mxu0 0
    %198 = vmatprep.subr.bf16.mxu0 0
    %199 = vmatpush1.bf16.msra.mxu0 0
    %200 = vmatprep.mubr.bf16.mxu0 0
    %201 = vmatmul.mubr.bf16.gmra.mrb[0].mxu0 %v154
    %v202 = vpop.f32.mrb[0].mxu0
    %v203 = vadd.f32 0.0, %v202
    %v204 = vpop.f32.mrb[0].mxu0
    %v205 = vpop.f32.mrb[0].mxu0
    %v206 = vadd.f32 0.0, %v205
    %v207 = vpop.f32.mrb[0].mxu0
    %208 = vmatprep.mubr.bf16.mxu0 0
    %209 = vmatmul.mubr.bf16.gmra.mrb[0].mxu0 %v157
    %v210 = vpop.f32.mrb[0].mxu0
    %v211 = vadd.f32 0.0, %v210
    %v212 = vpop.f32.mrb[0].mxu0
    %v213 = vpop.f32.mrb[0].mxu0
    %v214 = vadd.f32 0.0, %v213
    %v215 = vpop.f32.mrb[0].mxu0
    %216 = vmatprep.mubr.bf16.mxu0 0
    %217 = vmatmul.mubr.bf16.gmra.mrb[0].mxu0 %v160
    %v218 = vpop.f32.mrb[0].mxu0
    %v219 = vadd.f32 0.0, %v218
    %v220 = vpop.f32.mrb[0].mxu0
    %v221 = vpop.f32.mrb[0].mxu0
    %v222 = vadd.f32 0.0, %v221
    %v223 = vpop.f32.mrb[0].mxu0
    %224 = vmatprep.mubr.bf16.mxu0 0
    %225 = vmatmul.mubr.bf16.gmra.mrb[0].mxu0 %v163
    %v226 = vpop.f32.mrb[0].mxu0
    %v227 = vadd.f32 0.0, %v226
    %v228 = vpop.f32.mrb[0].mxu0
    %v229 = vpop.f32.mrb[0].mxu0
    %v230 = vadd.f32 0.0, %v229
    %v231 = vpop.f32.mrb[0].mxu0
    %232 = vdwg.mxu0
    %v233 = vpack.c.bf16 %v206, %v203
    %v234 = vpack.c.bf16 %v214, %v211
    %v235 = vpack.c.bf16 %v222, %v219
    %v236 = vpack.c.bf16 %v230, %v227
    %v241 = vunpack.c.l.b16 %v233
    %v242 = vunpack.c.h.b16 %v233
    %v243 = vunpack.c.l.b16 %v234
    %v244 = vunpack.c.h.b16 %v234
    %v245 = vunpack.c.l.b16 %v235
    %v246 = vunpack.c.h.b16 %v235
    %v247 = vunpack.c.l.b16 %v236
    %v248 = vunpack.c.h.b16 %v236
    %v249 = vpack.c.b16 %v241, %v241
    %v250 = vpack.c.b16 %v242, %v242
    %v251 = vpack.c.b16 %v243, %v243
    %v252 = vpack.c.b16 %v244, %v244
    %v253 = vpack.c.b16 %v245, %v245
    %v254 = vpack.c.b16 %v246, %v246
    %v255 = vpack.c.b16 %v247, %v247
    %v256 = vpack.c.b16 %v248, %v248
    %265 = vst [vmem:[#allocation6] sm:$0xf] %v249
    %266 = vst [vmem:[#allocation6 + $0x4] sm:$0xf] %v250
    %267 = vst [vmem:[#allocation6 + $0x8] sm:$0xf] %v251
    %268 = vst [vmem:[#allocation6 + $0xc] sm:$0xf] %v252
    %269 = vst [vmem:[#allocation6 + $0x10] sm:$0xf] %v253
    %270 = vst [vmem:[#allocation6 + $0x14] sm:$0xf] %v254
    %271 = vst [vmem:[#allocation6 + $0x18] sm:$0xf] %v255
    %272 = vst [vmem:[#allocation6 + $0x1c] sm:$0xf] %v256
    // Predicated region
    $region14: #{mask_forward.1} parent=1 // pred_check
      _
    $region15: #{mask_forward.1} parent=1 // pred_check_branch
      %274 = sbr.rel (0) target = $region17
    $region16: #{mask_forward.1} parent=1 // pred_region
      %s276 = ssub.s32 512, 512
      %277 = vsyncadd [#allocation5], %s276
      %s278 = sshll.u32 [#allocation6], 4
      %s279 = int_to_ptr.vmem [resolvable:$true] %s278
      %284 = dma.vmem_to_hbm [thread:$0]  %s279, 512, %s2, [#allocation5], 64, 64, 4
    $region17: #{mask_forward.1} parent=1 // pred_fallthru
      _
    // Predicated region
    $region18: #{mask_forward.1} parent=1 // pred_check
      _
    $region19: #{mask_forward.1} parent=1 // pred_check_branch
      %286 = sbr.rel (0) target = $region21
    $region20: #{mask_forward.1} parent=1 // pred_region
      %287 = dma.done [#allocation5], 512
    $region21: #{mask_forward.1} parent=1 // pred_fallthru
      _
    %288 = vsyncpa [#allocation4], 1
    %289 = vsyncpa [#allocation5], 1

</llo_original>
